<compile_context>
chip_gen: v7x
topology: tpu7x:2x2x1
jax: 0.10.0
libtpu: 0.0.40
codegen_flags: <defaults>
</compile_context>

<pallas_src>
import functools

import jax
import jax.numpy as jnp
from jax.experimental import pallas as pl
from jax.experimental.pallas import tpu as pltpu


# ----------------------------- hardware query ---------------------------------

def _vmem_capacity_bytes():
    try:
        return int(pltpu.get_tpu_info().vmem_capacity_bytes)
    except Exception:
        return 64 * 1024 * 1024  # conservative: v7x per-TensorCore VMEM


_VMEM_CAP = _vmem_capacity_bytes()
_BIG_VMEM = _VMEM_CAP >= 100 * 1024 * 1024          # v5e/v6e (128 MiB) vs v7x (64 MiB)
_DEFAULT_ROW_TILE = 1024 if _BIG_VMEM else 512


# ------------------------------- helpers ---------------------------------------

def _round_up(x, m):
    return ((x + m - 1) // m) * m


def _pad_to(arr, shape):
    pads = [(0, t - s) for s, t in zip(arr.shape, shape)]
    if all(p == (0, 0) for p in pads):
        return arr
    return jnp.pad(arr, pads)


def _vmem_limit(est_bytes):
    # Headroom over the working-set estimate, capped at ~85% of physical VMEM.
    return int(min(0.85 * _VMEM_CAP, max(32 * 1024 * 1024, int(1.5 * est_bytes))))


def _pick_row_tile(rows8, target):
    """Row tile (multiple of 8): balance per-step overhead vs. row padding."""
    target = max(8, min((target // 8) * 8, rows8))
    cands = {target}
    t = 8
    while t <= target:
        cands.add(t)
        t *= 2
    for d in range(target, 7, -8):       # largest divisor of rows8 -> no padding
        if rows8 % d == 0:
            cands.add(d)
            break
    best, best_cost = 8, None
    for t in sorted(cands):
        rows_p = _round_up(rows8, t)
        cost = rows_p + (rows_p // t) * 64   # padded HBM rows + ~64 rows/step overhead
        if best_cost is None or cost <= best_cost:
            best, best_cost = t, cost
    return best


def _shrink_tn(dout_p, tn):
    """Largest multiple of 128 that divides dout_p and is <= tn // 2."""
    k = dout_p // 128
    best = 0
    for d in range(1, k + 1):
        if k % d == 0 and d * 128 <= tn // 2:
            best = max(best, d * 128)
    return best if best else tn


def _block_spec(shape, index_map, *, single_buffer=False):
    # Grid-invariant operands don't need Pallas' default double buffer.
    if single_buffer and hasattr(pl, "Buffered"):
        try:
            return pl.BlockSpec(shape, index_map, pipeline_mode=pl.Buffered(1))
        except TypeError:
            pass
    return pl.BlockSpec(shape, index_map)


# ----------------- Fused LayerNorm (+ optional) + Linear kernel ----------------

def _norm_matmul_kernel(x_ref, g_ref, b_ref, w_ref, bias_ref, o_ref, *,
                        eps, dim, apply_norm):
    # x_ref: (TM, Dp)  g/b: (1, Dp)  w_ref: (Dp, TN)  bias_ref: (1, TN)
    x = x_ref[...].astype(jnp.float32)
    if apply_norm:
        inv_dim = 1.0 / dim
        mean = jnp.sum(x, axis=-1, keepdims=True) * inv_dim
        xc = x - mean
        if dim != x.shape[-1]:
            # Keep padded lanes out of the (centered, two-pass) variance.
            lane = jax.lax.broadcasted_iota(jnp.int32, x.shape, x.ndim - 1)
            xc = jnp.where(lane < dim, xc, 0.0)
        var = jnp.sum(xc * xc, axis=-1, keepdims=True) * inv_dim
        inv = jax.lax.rsqrt(var + eps)
        y = xc * inv * g_ref[...].astype(jnp.float32) + b_ref[...].astype(jnp.float32)
    else:
        y = x
    # Feed the MXU in the weight's storage dtype (bf16 by default -> f32 acc).
    acc = jnp.dot(y.astype(w_ref.dtype), w_ref[...],
                  preferred_element_type=jnp.float32)
    o_ref[...] = (acc + bias_ref[...].astype(jnp.float32)).astype(o_ref.dtype)


def _norm_matmul_pallas(x, gamma_p, beta_p, w_p, bias_p, *, dim, dout, eps,
                        apply_norm, row_tile=None):
    """Fused (LayerNorm(x) @ w) + bias (or x @ w + bias) in one pallas_call."""
    orig_shape = x.shape
    din = orig_shape[-1]
    assert din == dim, (din, dim)
    din_p, dout_p = int(w_p.shape[0]), int(w_p.shape[1])

    rows = 1
    for s in orig_shape[:-1]:
        rows *= int(s)
    rows = max(rows, 1)
    rows8 = _round_up(rows, 8)

    x_item = jnp.dtype(x.dtype).itemsize
    w_item = jnp.dtype(w_p.dtype).itemsize
    o_item = x_item

    target = row_tile if row_tile is not None else _DEFAULT_ROW_TILE
    budget = int(0.80 * _VMEM_CAP)

    tm = _pick_row_tile(rows8, target)
    tn = dout_p

    def est(tm_, tn_):
        n_steps_ = dout_p // tn_
        wbuf = 1 if n_steps_ == 1 else 2
        return (2 * tm_ * din_p * x_item              # x (double buffered)
                + wbuf * din_p * tn_ * w_item         # weight
                + 2 * tm_ * tn_ * o_item              # output (double buffered)
                + (2 * tm_ * din_p + tm_ * tn_) * 4   # in-kernel f32 temporaries
                + 4 * din_p * 4 + 4 * tn_ * 4)        # gamma / beta / bias

    while est(tm, tn) > budget and tn > 128:          # tile N for big weights
        new_tn = _shrink_tn(dout_p, tn)
        if new_tn >= tn:
            break
        tn = new_tn
    while est(tm, tn) > budget and tm > 8:
        tm = _pick_row_tile(rows8, max(8, (tm // 2 // 8) * 8))

    rows_p = _round_up(rows8, tm)
    n_steps = dout_p // tn
    row_steps = rows_p // tm

    # v7x has 2 TensorCores: make sure a "parallel" grid has >= 2 steps.
    if (not _BIG_VMEM) and n_steps * row_steps == 1 and rows8 >= 16:
        tm = _pick_row_tile(rows8, max(8, (tm // 2 // 8) * 8))
        rows_p = _round_up(rows8, tm)
        row_steps = rows_p // tm

    x2 = _pad_to(x.reshape(rows, din), (rows_p, din_p))
    single_w = n_steps == 1

    flops = 2 * rows * din * dout + (9 * rows * din if apply_norm else 0)
    bytes_acc = (rows_p * din_p * x_item + din_p * dout_p * w_item
                 + dout_p * 4 + rows_p * dout_p * o_item + 4 * din_p * 4)
    cost = pl.CostEstimate(flops=int(flops),
                           transcendentals=int(rows if apply_norm else 0),
                           bytes_accessed=int(bytes_acc))

    out = pl.pallas_call(
        functools.partial(_norm_matmul_kernel, eps=eps, dim=dim,
                          apply_norm=apply_norm),
        out_shape=jax.ShapeDtypeStruct((rows_p, dout_p), x.dtype),
        grid_spec=pltpu.PrefetchScalarGridSpec(
            num_scalar_prefetch=0,
            grid=(n_steps, row_steps),            # N outer, rows inner
            in_specs=[
                _block_spec((tm, din_p), lambda j, i: (i, 0)),
                _block_spec((1, din_p), lambda j, i: (0, 0), single_buffer=True),
                _block_spec((1, din_p), lambda j, i: (0, 0), single_buffer=True),
                _block_spec((din_p, tn), lambda j, i: (0, j), single_buffer=single_w),
                _block_spec((1, tn), lambda j, i: (0, j), single_buffer=single_w),
            ],
            out_specs=pl.BlockSpec((tm, tn), lambda j, i: (i, j)),
        ),
        compiler_params=pltpu.CompilerParams(
            dimension_semantics=("parallel", "parallel"),
            vmem_limit_bytes=_vmem_limit(est(tm, tn)),
        ),
        cost_estimate=cost,
    )(x2, gamma_p, beta_p, w_p, bias_p)

    if rows_p != rows or dout_p != dout:
        out = out[:rows, :dout]
    return out.reshape(orig_shape[:-1] + (dout,))


# -------------------- Standalone LayerNorm kernel (generic fn) -----------------

def _layernorm_kernel(x_ref, g_ref, b_ref, o_ref, *, eps, dim):
    x = x_ref[...].astype(jnp.float32)
    inv_dim = 1.0 / dim
    mean = jnp.sum(x, axis=-1, keepdims=True) * inv_dim
    xc = x - mean
    if dim != x.shape[-1]:
        lane = jax.lax.broadcasted_iota(jnp.int32, x.shape, x.ndim - 1)
        xc = jnp.where(lane < dim, xc, 0.0)
    var = jnp.sum(xc * xc, axis=-1, keepdims=True) * inv_dim
    inv = jax.lax.rsqrt(var + eps)
    o_ref[...] = (xc * inv * g_ref[...].astype(jnp.float32)
                  + b_ref[...].astype(jnp.float32)).astype(o_ref.dtype)


def layernorm_pallas(x, gamma_p, beta_p, *, dim, eps=1e-5, row_tile=None):
    """LayerNorm over the last axis; gamma/beta arrive pre-padded to (1, dim_p)."""
    orig_shape = x.shape
    din = orig_shape[-1]
    assert din == dim, (din, dim)
    din_p = int(gamma_p.shape[-1])

    rows = 1
    for s in orig_shape[:-1]:
        rows *= int(s)
    rows = max(rows, 1)
    rows8 = _round_up(rows, 8)
    item = jnp.dtype(x.dtype).itemsize

    target = row_tile if row_tile is not None else _DEFAULT_ROW_TILE
    budget = int(0.80 * _VMEM_CAP)
    tm = _pick_row_tile(rows8, target)

    def est(tm_):
        return 4 * tm_ * din_p * item + 2 * tm_ * din_p * 4 + 4 * din_p * 4

    while est(tm) > budget and tm > 8:
        tm = _pick_row_tile(rows8, max(8, (tm // 2 // 8) * 8))

    rows_p = _round_up(rows8, tm)
    if (not _BIG_VMEM) and rows_p // tm == 1 and rows8 >= 16:
        tm = _pick_row_tile(rows8, max(8, (tm // 2 // 8) * 8))
        rows_p = _round_up(rows8, tm)

    x2 = _pad_to(x.reshape(rows, din), (rows_p, din_p))

    cost = pl.CostEstimate(flops=int(9 * rows * din), transcendentals=int(rows),
                           bytes_accessed=int(2 * rows_p * din_p * item + 2 * din_p * 4))

    out = pl.pallas_call(
        functools.partial(_layernorm_kernel, eps=eps, dim=dim),
        out_shape=jax.ShapeDtypeStruct((rows_p, din_p), x.dtype),
        grid_spec=pltpu.PrefetchScalarGridSpec(
            num_scalar_prefetch=0,
            grid=(rows_p // tm,),
            in_specs=[
                _block_spec((tm, din_p), lambda i: (i, 0)),
                _block_spec((1, din_p), lambda i: (0, 0), single_buffer=True),
                _block_spec((1, din_p), lambda i: (0, 0), single_buffer=True),
            ],
            out_specs=pl.BlockSpec((tm, din_p), lambda i: (i, 0)),
        ),
        compiler_params=pltpu.CompilerParams(
            dimension_semantics=("parallel",),
            vmem_limit_bytes=_vmem_limit(est(tm)),
        ),
        cost_estimate=cost,
    )(x2, gamma_p, beta_p)

    if rows_p != rows or din_p != din:
        out = out[:rows, :din]
    return out.reshape(orig_shape)


# --------------------------------- modules -------------------------------------

class PallasLinear:
    """y = x @ w + b. Weight/bias are padded (and weight optionally bf16) once."""

    def __init__(self, w, b, mxu_dtype=jnp.bfloat16):
        w = jnp.asarray(w)
        b = jnp.asarray(b)
        self.din, self.dout = int(w.shape[0]), int(w.shape[1])
        din_p = _round_up(self.din, 128)
        dout_p = _round_up(self.dout, 128)
        w_p = _pad_to(w, (din_p, dout_p))
        if mxu_dtype is not None and w_p.dtype == jnp.float32:
            # MXU native input dtype is bf16 on v5e/v6e/v7x; f32xf32 is 3-6x slower.
            w_p = w_p.astype(mxu_dtype)
        self.w_p = w_p
        self.b_p = _pad_to(b.reshape(1, self.dout), (1, dout_p)).astype(jnp.float32)
        self._ones = jnp.ones((1, din_p), jnp.float32)
        self._zeros = jnp.zeros((1, din_p), jnp.float32)

    def __call__(self, x):
        return _norm_matmul_pallas(x, self._ones, self._zeros, self.w_p, self.b_p,
                                   dim=self.din, dout=self.dout, eps=0.0,
                                   apply_norm=False)


class PreNormPallas:
    """fn(LayerNorm(dim)(x)). If fn is a PallasLinear, norm+matmul are fused."""

    def __init__(self, dim, fn, *, eps=1e-5, weight=None, bias=None,
                 param_dtype=jnp.float32):
        self.dim = int(dim)
        self.eps = float(eps)
        self.fn = fn
        din_p = _round_up(self.dim, 128)
        # nn.LayerNorm(dim) default init: weight=1, bias=0, eps=1e-5 (pre-padded).
        g = jnp.ones((self.dim,), param_dtype) if weight is None else jnp.asarray(weight)
        bt = jnp.zeros((self.dim,), param_dtype) if bias is None else jnp.asarray(bias)
        self.gamma_p = _pad_to(g.reshape(1, self.dim), (1, din_p))
        self.beta_p = _pad_to(bt.reshape(1, self.dim), (1, din_p))

    def __call__(self, x, **kwargs):
        if isinstance(self.fn, PallasLinear) and not kwargs and self.fn.din == self.dim:
            # Fused fast path: LayerNorm + Linear in one pallas_call.
            return _norm_matmul_pallas(x, self.gamma_p, self.beta_p,
                                       self.fn.w_p, self.fn.b_p,
                                       dim=self.dim, dout=self.fn.dout,
                                       eps=self.eps, apply_norm=True)
        # Generic path: Pallas LayerNorm, then arbitrary fn (runs as plain JAX).
        y = layernorm_pallas(x, self.gamma_p, self.beta_p, dim=self.dim, eps=self.eps)
        return self.fn(y, **kwargs)


# ----------------------------------- test --------------------------------------

if __name__ == "__main__":
    batch, seq, dim = 2, 8, 32
    key = jax.random.PRNGKey(0)
    kx, kw, kb = jax.random.split(key, 3)

    x = jax.random.normal(kx, (batch, seq, dim), dtype=jnp.float32)
    w = jax.random.normal(kw, (dim, dim), dtype=jnp.float32) * 0.02
    b = jax.random.normal(kb, (dim,), dtype=jnp.float32) * 0.02

    def ln_ref(t, eps=1e-5):
        m = jnp.mean(t, axis=-1, keepdims=True)
        v = jnp.mean((t - m) ** 2, axis=-1, keepdims=True)
        return (t - m) * jax.lax.rsqrt(v + eps)

    ref = ln_ref(x) @ w + b

    # 1) Fused LayerNorm+Linear, exact f32 MXU path.
    pre_f32 = PreNormPallas(dim, PallasLinear(w, b, mxu_dtype=None))
    out_f32 = jax.block_until_ready(pre_f32(x))
    assert out_f32.shape == (batch, seq, dim)
    assert jnp.allclose(out_f32, ref, atol=1e-4, rtol=1e-4)

    # 2) Fused path with bf16-fed MXU (default; native MXU dtype on v5e/v6e/v7x).
    pre_bf16 = PreNormPallas(dim, PallasLinear(w, b))
    out_bf16 = jax.block_until_ready(pre_bf16(x))
    assert jnp.allclose(out_bf16, ref, atol=1e-2, rtol=5e-2)

    # 3) Generic (unfused) path: ragged rows, non-128 dim, arbitrary wrapped fn.
    seq2, dim2 = 7, 48
    x2 = jax.random.normal(kx, (batch, seq2, dim2), dtype=jnp.float32)
    w2 = jax.random.normal(kw, (dim2, dim2), dtype=jnp.float32) * 0.02
    b2 = jax.random.normal(kb, (dim2,), dtype=jnp.float32) * 0.02
    pre2 = PreNormPallas(dim2, lambda t: t @ w2 + b2)
    out2 = jax.block_until_ready(pre2(x2))
    ref2 = ln_ref(x2) @ w2 + b2
    assert out2.shape == (batch, seq2, dim2)
    assert jnp.allclose(out2, ref2, atol=1e-4, rtol=1e-4)

    print("KERNEL_OK")
</pallas_src>

<mosaic_0001>
module attributes {stable_mosaic.version = 11 : i64} {
  func.func @_norm_matmul_kernel(%arg0: i32, %arg1: i32, %arg2: memref<8x128xf32, #tpu.memory_space<vmem>>, %arg3: memref<1x128xf32, #tpu.memory_space<vmem>>, %arg4: memref<1x128xf32, #tpu.memory_space<vmem>>, %arg5: memref<128x128xf32, #tpu.memory_space<vmem>>, %arg6: memref<1x128xf32, #tpu.memory_space<vmem>>, %arg7: memref<8x128xf32, #tpu.memory_space<vmem>>) attributes {dimension_semantics = [#tpu.dimension_semantics<parallel>, #tpu.dimension_semantics<parallel>], iteration_bounds = array<i64: 1, 2>, scalar_prefetch = 0 : i64, scratch_operands = 0 : i64, tpu.core_type = #tpu.core_type<tc>, window_params = [{transform_indices = @transform_0, window_bounds = array<i64: 8, 128>}, {pipeline_mode = #tpu.pipeline_mode<synchronous>, transform_indices = @transform_1, window_bounds = array<i64: 1, 128>}, {pipeline_mode = #tpu.pipeline_mode<synchronous>, transform_indices = @transform_2, window_bounds = array<i64: 1, 128>}, {pipeline_mode = #tpu.pipeline_mode<synchronous>, transform_indices = @transform_3, window_bounds = array<i64: 128, 128>}, {pipeline_mode = #tpu.pipeline_mode<synchronous>, transform_indices = @transform_4, window_bounds = array<i64: 1, 128>}, {transform_indices = @transform_5, window_bounds = array<i64: 8, 128>}]} {
    %c0 = arith.constant 0 : index
    %c0_0 = arith.constant 0 : index
    %0 = vector.load %arg2[%c0, %c0_0] : memref<8x128xf32, #tpu.memory_space<vmem>>, vector<8x128xf32>
    %cst = arith.constant dense<0.000000e+00> : vector<8xf32>
    %1 = vector.multi_reduction <add>, %0, %cst [1] : vector<8x128xf32> to vector<8xf32>
    %2 = vector.shape_cast %1 : vector<8xf32> to vector<8x1xf32>
    %cst_1 = arith.constant 3.125000e-02 : f32
    %3 = vector.broadcast %cst_1 : f32 to vector<8x1xf32>
    %4 = arith.mulf %2, %3 : vector<8x1xf32>
    %5 = vector.broadcast %4 : vector<8x1xf32> to vector<8x128xf32>
    %6 = arith.subf %0, %5 : vector<8x128xf32>
    %7 = tpu.iota {dimensions = array<i32: 1>} : vector<8x128xi32>
    %c32_i32 = arith.constant 32 : i32
    %8 = vector.broadcast %c32_i32 : i32 to vector<8x128xi32>
    %9 = arith.cmpi slt, %7, %8 : vector<8x128xi32>
    %cst_2 = arith.constant 0.000000e+00 : f32
    %10 = vector.broadcast %cst_2 : f32 to vector<8x128xf32>
    %11 = arith.select %9, %6, %10 : vector<8x128xi1>, vector<8x128xf32>
    %12 = arith.mulf %11, %11 : vector<8x128xf32>
    %cst_3 = arith.constant dense<0.000000e+00> : vector<8xf32>
    %13 = vector.multi_reduction <add>, %12, %cst_3 [1] : vector<8x128xf32> to vector<8xf32>
    %14 = vector.shape_cast %13 : vector<8xf32> to vector<8x1xf32>
    %cst_4 = arith.constant 3.125000e-02 : f32
    %15 = vector.broadcast %cst_4 : f32 to vector<8x1xf32>
    %16 = arith.mulf %14, %15 : vector<8x1xf32>
    %cst_5 = arith.constant 9.99999974E-6 : f32
    %17 = vector.broadcast %cst_5 : f32 to vector<8x1xf32>
    %18 = arith.addf %16, %17 : vector<8x1xf32>
    %19 = math.rsqrt %18 : vector<8x1xf32>
    %20 = vector.broadcast %19 : vector<8x1xf32> to vector<8x128xf32>
    %21 = arith.mulf %11, %20 : vector<8x128xf32>
    %c0_6 = arith.constant 0 : index
    %c0_7 = arith.constant 0 : index
    %22 = vector.load %arg3[%c0_6, %c0_7] : memref<1x128xf32, #tpu.memory_space<vmem>>, vector<1x128xf32>
    %23 = vector.broadcast %22 : vector<1x128xf32> to vector<8x128xf32>
    %24 = arith.mulf %21, %23 : vector<8x128xf32>
    %c0_8 = arith.constant 0 : index
    %c0_9 = arith.constant 0 : index
    %25 = vector.load %arg4[%c0_8, %c0_9] : memref<1x128xf32, #tpu.memory_space<vmem>>, vector<1x128xf32>
    %26 = vector.broadcast %25 : vector<1x128xf32> to vector<8x128xf32>
    %27 = arith.addf %24, %26 : vector<8x128xf32>
    %c0_10 = arith.constant 0 : index
    %c0_11 = arith.constant 0 : index
    %28 = vector.load %arg5[%c0_10, %c0_11] : memref<128x128xf32, #tpu.memory_space<vmem>>, vector<128x128xf32>
    %cst_12 = arith.constant dense<0.000000e+00> : vector<8x128xf32>
    %29 = tpu.matmul %27, %28, %cst_12 {dimension_numbers = #tpu.dot_dimension_numbers<[1], [0], [0], [1], [0, 0, 1, 1], [], []>} : vector<8x128xf32>, vector<128x128xf32>, vector<8x128xf32> -> vector<8x128xf32>
    %c0_13 = arith.constant 0 : index
    %c0_14 = arith.constant 0 : index
    %30 = vector.load %arg6[%c0_13, %c0_14] : memref<1x128xf32, #tpu.memory_space<vmem>>, vector<1x128xf32>
    %31 = vector.broadcast %30 : vector<1x128xf32> to vector<8x128xf32>
    %32 = arith.addf %29, %31 : vector<8x128xf32>
    %c0_15 = arith.constant 0 : index
    %c0_16 = arith.constant 0 : index
    %33 = vector.load %arg7[%c0_15, %c0_16] : memref<8x128xf32, #tpu.memory_space<vmem>>, vector<8x128xf32>
    tpu.vector_store %arg7[%c0_15, %c0_16], %32 {strides = array<i32>} : memref<8x128xf32, #tpu.memory_space<vmem>>, vector<8x128xf32>,
    return
  }
  func.func @transform_0(%arg0: i32, %arg1: i32) -> (i32, i32) {
    %c0_i32 = arith.constant 0 : i32
    %c0_i32_0 = arith.constant 0 : i32
    return %arg1, %c0_i32 : i32, i32
  }
  func.func @transform_1(%arg0: i32, %arg1: i32) -> (i32, i32) {
    %c0_i32 = arith.constant 0 : i32
    %c0_i32_0 = arith.constant 0 : i32
    %c0_i32_1 = arith.constant 0 : i32
    return %c0_i32, %c0_i32_0 : i32, i32
  }
  func.func @transform_2(%arg0: i32, %arg1: i32) -> (i32, i32) {
    %c0_i32 = arith.constant 0 : i32
    %c0_i32_0 = arith.constant 0 : i32
    %c0_i32_1 = arith.constant 0 : i32
    return %c0_i32, %c0_i32_0 : i32, i32
  }
  func.func @transform_3(%arg0: i32, %arg1: i32) -> (i32, i32) {
    %c0_i32 = arith.constant 0 : i32
    %c0_i32_0 = arith.constant 0 : i32
    return %c0_i32, %arg0 : i32, i32
  }
  func.func @transform_4(%arg0: i32, %arg1: i32) -> (i32, i32) {
    %c0_i32 = arith.constant 0 : i32
    %c0_i32_0 = arith.constant 0 : i32
    return %c0_i32, %arg0 : i32, i32
  }
  func.func @transform_5(%arg0: i32, %arg1: i32) -> (i32, i32) {
    %c0_i32 = arith.constant 0 : i32
    return %arg1, %arg0 : i32, i32
  }
}

</mosaic_0001>

<llo_original>
// kernel: tpu_custom_call.1
$region0: #{tpu_custom_call.1}
  #allocation0 [shape = 'u32[]', space=smem, size = 0x4, offset = 0x4, fixed_abs, tag = 'smem constant byte address 0x4 - core index']
  #allocation1 [shape = 'u32[144,128]{1,0:T(1,128)}', space=vmem, size = 0x12000, scoped, tag = 'internal scratch']
  %s0 = inlined_call_operand.hbm [shape: f32[16,128], index: 0, kind: input, shape index: {}]
  %s1 = inlined_call_operand.vmem [shape: f32[1,128], index: 1, kind: input, shape index: {}]
  %s2 = inlined_call_operand.vmem [shape: f32[1,128], index: 2, kind: input, shape index: {}]
  %s3 = inlined_call_operand.hbm [shape: f32[128,128], index: 3, kind: input, shape index: {}]
  %s4 = inlined_call_operand.vmem [shape: f32[1,128], index: 4, kind: input, shape index: {}]
  %s5 = inlined_call_operand.hbm [shape: f32[16,128], index: 5, kind: output, shape index: {}]
  %s6 = sld [smem:[#allocation0]]
  $region61: #{tpu_custom_call.1} parent=0
    _
  %s8 = ssub.s32 1, %s6
  %s9 = scalar_select 0, %s8, %s6
  $region1: #{tpu_custom_call.1} parent=0
    #allocation2 [shape = 'u8[8192]{0}', space=vmem, size = 0x2000, scoped, tag = 'input window, operand 0']
    #allocation3 [shape = 's32[2]{0}', space=sflag, size = 0x8, scoped, tag = 'scoped memory for tpu_custom_call.1']
    #allocation4 [shape = 's32[2]{0}', space=sflag, size = 0x8, scoped, tag = 'scoped memory for tpu_custom_call.1']
    #allocation5 [shape = 'u8[65536]{0}', space=vmem, size = 0x10000, scoped, tag = 'input window, operand 3, single buffered']
    #allocation6 [shape = 's32[1]{0}', space=sflag, size = 0x4, scoped, tag = 'scoped memory for tpu_custom_call.1']
    #allocation7 [shape = 'u8[8192]{0}', space=vmem, size = 0x2000, scoped, tag = 'output window, operand 0']
    %10 = vsyncpa [#allocation3], 0
    %s11 = scalar_lea.sflag [#allocation3], 1
    %12 = vsyncpa %s11, 0
    %13 = vsyncpa [#allocation6], 0
    %14 = vsyncpa [#allocation4], 0
    %s15 = scalar_lea.sflag [#allocation4], 1
    %16 = vsyncpa %s15, 0
    loop: start=0, step=1, limit=4
    $region2: #{tpu_custom_call.1} parent=1 // loop_pre_header
      _
    $region3: #{tpu_custom_call.1} parent=1 // loop_header
      %s18 = sphi 0, %s22
      %p19 = scmp.ge.s32.totalorder %s18, 4
      %s25 = sphi 0, %s37
      %s26 = sphi 0, %s33
      %s27 = sphi 0, %s25
      %s28 = sphi 0, %s26
      %s29 = sphi 0, %s27
      %s30 = sphi 0, %s28
      %s40 = sphi 0, %s42
      %s43 = sphi 0, %s40
      %s44 = sphi 0, %s43
      %s60 = sphi 0, %s44
      %s64 = sphi 0, %s64
      %s66 = sphi 0, %s64
      %s67 = sphi 0, %s66
      %s81 = sphi 0, %s67
      %s85 = sphi 0, %s85
      %s87 = sphi 0, %s85
      %s88 = sphi 0, %s87
      %s102 = sphi 0, %s88
      %s108 = sphi 0, %s110
      %s111 = sphi 0, %s108
      %s112 = sphi 0, %s111
      %s128 = sphi 0, %s112
      %s134 = sphi 0, %s136
      %s137 = sphi 0, %s134
      %s138 = sphi 0, %s137
      %s154 = sphi 0, %s138
      %s162 = sphi 0, %s164
      %s165 = sphi 0, %s162
      %s166 = sphi 0, %s165
      %s182 = sphi 0, %s166
    $region4: #{tpu_custom_call.1} parent=1 // loop_header_branch
      %21 = sbr.rel (%p19) target = $region8
    $region5: #{tpu_custom_call.1} parent=1 // loop_body
      %s23 = ssub.s32 %s18, 1
      %s24 = ssub.s32 %s18, 2
      %s31 = sadd.s32 1, %s26
      %p32 = scmp.ge.s32.totalorder %s31, 2
      %s33 = scalar_select %p32, 0, %s31
      %s34 = sadd.s32 1, %s25
      %s35 = scalar_select %p32, %s34, %s25
      %p36 = scmp.ge.s32.totalorder %s35, 1
      %s37 = scalar_select %p36, 0, %s35
      %s38 = ssub.s32 %s26, %s33
      %p39 = scmp.eq.s32.totalorder %s38, 0
      %s41 = sadd.s32 %s40, 1
      %s42 = scalar_select %p39, %s40, %s41
      %p45 = pneg %p39
      %p46 = scmp.eq.s32.totalorder %s18, 1
      %p47 = por %p45, %p46
      %p48 = scmp.ne.s32.totalorder %s40, %s43
      %p49 = scmp.eq.s32.totalorder %s18, 0
      %p50 = por %p48, %p49
      %p51 = scmp.ne.s32.totalorder %s40, %s43
      %p52 = scmp.eq.s32.totalorder %s23, 1
      %p53 = por %p51, %p52
      %p54 = scmp.ne.s32.totalorder %s43, %s44
      %p55 = scmp.eq.s32.totalorder %s23, 0
      %p56 = por %p54, %p55
      %p57 = scmp.ne.s32.totalorder %s43, %s44
      %p58 = scmp.eq.s32.totalorder %s24, 1
      %p59 = por %p57, %p58
      %p61 = scmp.ne.s32.totalorder %s44, %s60
      %p62 = scmp.eq.s32.totalorder %s24, 0
      %p63 = por %p61, %p62
      %s65 = sadd.s32 %s64, 1
      %p68 = scmp.eq.s32.totalorder %s18, 1
      %p69 = scmp.ne.s32.totalorder %s64, %s66
      %p70 = scmp.eq.s32.totalorder %s18, 0
      %p71 = por %p69, %p70
      %p72 = scmp.ne.s32.totalorder %s64, %s66
      %p73 = scmp.eq.s32.totalorder %s23, 1
      %p74 = por %p72, %p73
      %p75 = scmp.ne.s32.totalorder %s66, %s67
      %p76 = scmp.eq.s32.totalorder %s23, 0
      %p77 = por %p75, %p76
      %p78 = scmp.ne.s32.totalorder %s66, %s67
      %p79 = scmp.eq.s32.totalorder %s24, 1
      %p80 = por %p78, %p79
      %p82 = scmp.ne.s32.totalorder %s67, %s81
      %p83 = scmp.eq.s32.totalorder %s24, 0
      %p84 = por %p82, %p83
      %s86 = sadd.s32 %s85, 1
      %p89 = scmp.eq.s32.totalorder %s18, 1
      %p90 = scmp.ne.s32.totalorder %s85, %s87
      %p91 = scmp.eq.s32.totalorder %s18, 0
      %p92 = por %p90, %p91
      %p93 = scmp.ne.s32.totalorder %s85, %s87
      %p94 = scmp.eq.s32.totalorder %s23, 1
      %p95 = por %p93, %p94
      %p96 = scmp.ne.s32.totalorder %s87, %s88
      %p97 = scmp.eq.s32.totalorder %s23, 0
      %p98 = por %p96, %p97
      %p99 = scmp.ne.s32.totalorder %s87, %s88
      %p100 = scmp.eq.s32.totalorder %s24, 1
      %p101 = por %p99, %p100
      %p103 = scmp.ne.s32.totalorder %s88, %s102
      %p104 = scmp.eq.s32.totalorder %s24, 0
      %p105 = por %p103, %p104
      %s106 = ssub.s32 %s25, %s37
      %p107 = scmp.eq.s32.totalorder %s106, 0
      %s109 = sadd.s32 %s108, 1
      %s110 = scalar_select %p107, %s108, %s109
      %p113 = pneg %p107
      %p114 = scmp.eq.s32.totalorder %s18, 1
      %p115 = por %p113, %p114
      %p116 = scmp.ne.s32.totalorder %s108, %s111
      %p117 = scmp.eq.s32.totalorder %s18, 0
      %p118 = por %p116, %p117
      %p119 = scmp.ne.s32.totalorder %s108, %s111
      %p120 = scmp.eq.s32.totalorder %s23, 1
      %p121 = por %p119, %p120
      %p122 = scmp.ne.s32.totalorder %s111, %s112
      %p123 = scmp.eq.s32.totalorder %s23, 0
      %p124 = por %p122, %p123
      %p125 = scmp.ne.s32.totalorder %s111, %s112
      %p126 = scmp.eq.s32.totalorder %s24, 1
      %p127 = por %p125, %p126
      %p129 = scmp.ne.s32.totalorder %s112, %s128
      %p130 = scmp.eq.s32.totalorder %s24, 0
      %p131 = por %p129, %p130
      %s132 = ssub.s32 %s25, %s37
      %p133 = scmp.eq.s32.totalorder %s132, 0
      %s135 = sadd.s32 %s134, 1
      %s136 = scalar_select %p133, %s134, %s135
      %p139 = pneg %p133
      %p140 = scmp.eq.s32.totalorder %s18, 1
      %p141 = por %p139, %p140
      %p142 = scmp.ne.s32.totalorder %s134, %s137
      %p143 = scmp.eq.s32.totalorder %s18, 0
      %p144 = por %p142, %p143
      %p145 = scmp.ne.s32.totalorder %s134, %s137
      %p146 = scmp.eq.s32.totalorder %s23, 1
      %p147 = por %p145, %p146
      %p148 = scmp.ne.s32.totalorder %s137, %s138
      %p149 = scmp.eq.s32.totalorder %s23, 0
      %p150 = por %p148, %p149
      %p151 = scmp.ne.s32.totalorder %s137, %s138
      %p152 = scmp.eq.s32.totalorder %s24, 1
      %p153 = por %p151, %p152
      %p155 = scmp.ne.s32.totalorder %s138, %s154
      %p156 = scmp.eq.s32.totalorder %s24, 0
      %p157 = por %p155, %p156
      %s158 = ssub.s32 %s26, %s33
      %s159 = ssub.s32 %s25, %s37
      %s160 = sor.u32 %s158, %s159
      %p161 = scmp.eq.s32.totalorder %s160, 0
      %s163 = sadd.s32 %s162, 1
      %s164 = scalar_select %p161, %s162, %s163
      %p167 = pneg %p161
      %p168 = scmp.eq.s32.totalorder %s18, 1
      %p169 = por %p167, %p168
      %p170 = scmp.ne.s32.totalorder %s162, %s165
      %p171 = scmp.eq.s32.totalorder %s18, 0
      %p172 = por %p170, %p171
      %p173 = scmp.ne.s32.totalorder %s162, %s165
      %p174 = scmp.eq.s32.totalorder %s23, 1
      %p175 = por %p173, %p174
      %p176 = scmp.ne.s32.totalorder %s165, %s166
      %p177 = scmp.eq.s32.totalorder %s23, 0
      %p178 = por %p176, %p177
      %p179 = scmp.ne.s32.totalorder %s165, %s166
      %p180 = scmp.eq.s32.totalorder %s24, 1
      %p181 = por %p179, %p180
      %p183 = scmp.ne.s32.totalorder %s166, %s182
      %p184 = scmp.eq.s32.totalorder %s24, 0
      %p185 = por %p183, %p184
      %p186 = scmp.le.s32.totalorder 1, %s18
      %p187 = scmp.lt.s32.totalorder %s18, 3
      %p188 = pnand %p186, %p187
      %p189 = pneg %p188
      // Predicated region
      $region9: #{tpu_custom_call.1} parent=5 // pred_check
        _
      $region10: #{tpu_custom_call.1} parent=5 // pred_check_branch
        %191 = sbr.rel (%p188) target = $region12
      $region11: #{tpu_custom_call.1} parent=5 // pred_region
        %s192 = ssub.s32 %s18, 1
        // Predicated region
        $region13: #{tpu_custom_call.1} parent=11 // pred_check
          %p193 = pneg %p77
        $region14: #{tpu_custom_call.1} parent=11 // pred_check_branch
          %195 = sbr.rel (%p193) target = $region16
        $region15: #{tpu_custom_call.1} parent=11 // pred_region
          _
        $region16: #{tpu_custom_call.1} parent=11 // pred_fallthru
          _
        // Predicated region
        $region17: #{tpu_custom_call.1} parent=11 // pred_check
          %p196 = pneg %p98
        $region18: #{tpu_custom_call.1} parent=11 // pred_check_branch
          %198 = sbr.rel (%p196) target = $region20
        $region19: #{tpu_custom_call.1} parent=11 // pred_region
          _
        $region20: #{tpu_custom_call.1} parent=11 // pred_fallthru
          _
        // Predicated region
        $region21: #{tpu_custom_call.1} parent=11 // pred_check
          %p199 = pneg %p124
        $region22: #{tpu_custom_call.1} parent=11 // pred_check_branch
          %201 = sbr.rel (%p199) target = $region24
        $region23: #{tpu_custom_call.1} parent=11 // pred_region
          %s203 = ssub.s32 2048, 2048
          %204 = vsyncadd [#allocation6], %s203
          %s205 = smul.addr %s27, 128
          %s206 = scalar_lea.hbm %s3, %s205
          %s207 = sshll.u32 [#allocation5], 4
          %s208 = int_to_ptr.vmem [resolvable:$true] %s207
          %213 = dma.hbm_to_vmem [thread:$0]  %s206, 2048, %s208, [#allocation6], 128, 128, 8
        $region24: #{tpu_custom_call.1} parent=11 // pred_fallthru
          _
        // Predicated region
        $region25: #{tpu_custom_call.1} parent=11 // pred_check
          %p214 = pneg %p150
        $region26: #{tpu_custom_call.1} parent=11 // pred_check_branch
          %216 = sbr.rel (%p214) target = $region28
        $region27: #{tpu_custom_call.1} parent=11 // pred_region
          %p217 = scmp.lt.s32.totalorder %s27, 0
          %s218 = scalar_select %p217, %s27, 0
          %s219 = scalar_lea.vmem %s4, %s218
        $region28: #{tpu_custom_call.1} parent=11 // pred_fallthru
          _
      $region12: #{tpu_custom_call.1} parent=5 // pred_fallthru
        _
      %p220 = scmp.lt.s32.totalorder %s18, 2
      // Predicated region
      $region29: #{tpu_custom_call.1} parent=5 // pred_check
        %p221 = pneg %p220
      $region30: #{tpu_custom_call.1} parent=5 // pred_check_branch
        %223 = sbr.rel (%p221) target = $region32
      $region31: #{tpu_custom_call.1} parent=5 // pred_region
        // Predicated region
        $region33: #{tpu_custom_call.1} parent=31 // pred_check
          %p224 = pneg %p50
        $region34: #{tpu_custom_call.1} parent=31 // pred_check_branch
          %226 = sbr.rel (%p224) target = $region36
        $region35: #{tpu_custom_call.1} parent=31 // pred_region
          %s227 = sand.u32 %s40, 1
          %s228 = scalar_lea.sflag [#allocation3], %s227
          %s229 = sand.u32 %s40, 1
          %s230 = smul.addr %s229, 8
          %s231 = scalar_lea.vmem [#allocation2], %s230
          %s233 = ssub.s32 128, 128
          %234 = vsyncadd %s228, %s233
          %s235 = smul.addr %s26, 128
          %s236 = scalar_lea.hbm %s0, %s235
          %s238 = sshll.u32 %s231, 4
          %s239 = int_to_ptr.vmem [resolvable:$true] %s238
          %241 = dma.hbm_to_vmem [thread:$0]  %s236, 128, %s239, %s228
        $region36: #{tpu_custom_call.1} parent=31 // pred_fallthru
          _
      $region32: #{tpu_custom_call.1} parent=5 // pred_fallthru
        _
      %p242 = scmp.le.s32.totalorder 1, %s18
      %p243 = scmp.lt.s32.totalorder %s18, 3
      %p244 = pnand %p242, %p243
      %p245 = pneg %p244
      // Predicated region
      $region37: #{tpu_custom_call.1} parent=5 // pred_check
        _
      $region38: #{tpu_custom_call.1} parent=5 // pred_check_branch
        %247 = sbr.rel (%p244) target = $region40
      $region39: #{tpu_custom_call.1} parent=5 // pred_region
        %s248 = ssub.s32 %s18, 1
        %s249 = sand.u32 %s43, 1
        %s250 = scalar_lea.sflag [#allocation3], %s249
        %s251 = sand.u32 %s43, 1
        %s252 = smul.addr %s251, 8
        %s253 = scalar_lea.vmem [#allocation2], %s252
        // Predicated region
        $region41: #{tpu_custom_call.1} parent=39 // pred_check
          %p254 = pneg %p56
        $region42: #{tpu_custom_call.1} parent=39 // pred_check_branch
          %256 = sbr.rel (%p254) target = $region44
        $region43: #{tpu_custom_call.1} parent=39 // pred_region
          %257 = dma.done %s250, 128
        $region44: #{tpu_custom_call.1} parent=39 // pred_fallthru
          _
        // Predicated region
        $region45: #{tpu_custom_call.1} parent=39 // pred_check
          %p258 = pneg %p124
        $region46: #{tpu_custom_call.1} parent=39 // pred_check_branch
          %260 = sbr.rel (%p258) target = $region48
        $region47: #{tpu_custom_call.1} parent=39 // pred_region
          %261 = dma.done [#allocation6], 2048
        $region48: #{tpu_custom_call.1} parent=39 // pred_fallthru
          _
        %s262 = sand.u32 %s43, 1
        %s263 = scalar_lea.sflag [#allocation3], %s262
        %s264 = sand.u32 %s43, 1
        %s265 = smul.addr %s264, 8
        %s266 = scalar_lea.vmem [#allocation2], %s265
        %p267 = pneg %p56
        %p268 = pneg %p53
        %p269 = pneg %p77
        %p270 = pneg %p74
        %p271 = pneg %p98
        %p272 = pneg %p95
        %p273 = pneg %p124
        %p274 = pneg %p121
        %p275 = scmp.lt.s32.totalorder %s27, 0
        %s276 = scalar_select %p275, %s27, 0
        %s277 = scalar_lea.vmem %s4, %s276
        %p278 = pneg %p150
        %p279 = pneg %p147
        %p280 = pneg %p178
        %p281 = pneg %p175
        %s282 = sand.u32 %s165, 1
        %s283 = scalar_lea.sflag [#allocation4], %s282
        %s284 = sand.u32 %s165, 1
        %s285 = smul.addr %s284, 8
        %s286 = scalar_lea.vmem [#allocation7], %s285
        %p287 = scmp.lt.s32.totalorder %s27, 0
        %s288 = scalar_select %p287, %s27, 0
        %s289 = scalar_lea.vmem %s4, %s288
        %v290 = vld [vmem:[%s253] sm:$0xff]
        %291 = vadd.xlane.f32.xlu0 %v290
        %v292 = vpop.xlane.xlu0 %291
        %v293 = vmul.f32 %v292, 0.03125
        %v294 = vsub.f32 %v290, %v293
        %v295 = vlaneseq
        %v296 = vand.u32 %v295, 127
        %vm297 = vcmp.lt.s32.totalorder %v296, 32
        %v298 = vsel %vm297, %v294, 0.0
        %v299 = vmul.f32 %v298, %v298
        %300 = vadd.xlane.f32.xlu0 %v299
        %v301 = vpop.xlane.xlu0 %300
        %v302 = vmul.f32 %v301, 0.03125
        %v303 = vadd.f32 %v302, 1e-05
        %v304 = vrsqrt.pop %v303
        %v305 = vmul.f32 %v298, %v304
        %v306 = vld [vmem:[%s1] sm:$0x1]
        %v308 = vlaneseq
        %v309 = vshrl.u32 %v308, 7
        %v310 = vsub.s32 0, %v309
        %v311 = vrot.slane %v306, %v310
        %v313 = vmul.f32 %v305, %v311
        %v314 = vld [vmem:[%s2] sm:$0x1]
        %v316 = vlaneseq
        %v317 = vshrl.u32 %v316, 7
        %v318 = vsub.s32 0, %v317
        %v319 = vrot.slane %v314, %v318
        %v321 = vadd.f32 %v313, %v319
        %v322 = vld [vmem:[#allocation5] sm:$0xff]
        %v323 = vld [vmem:[#allocation5 + $0x8] sm:$0xff]
        %v324 = vld [vmem:[#allocation5 + $0x10] sm:$0xff]
        %v325 = vld [vmem:[#allocation5 + $0x18] sm:$0xff]
        %v326 = vld [vmem:[#allocation5 + $0x20] sm:$0xff]
        %v327 = vld [vmem:[#allocation5 + $0x28] sm:$0xff]
        %v328 = vld [vmem:[#allocation5 + $0x30] sm:$0xff]
        %v329 = vld [vmem:[#allocation5 + $0x38] sm:$0xff]
        %v330 = vld [vmem:[#allocation5 + $0x40] sm:$0xff]
        %v331 = vld [vmem:[#allocation5 + $0x48] sm:$0xff]
        %v332 = vld [vmem:[#allocation5 + $0x50] sm:$0xff]
        %v333 = vld [vmem:[#allocation5 + $0x58] sm:$0xff]
        %v334 = vld [vmem:[#allocation5 + $0x60] sm:$0xff]
        %v335 = vld [vmem:[#allocation5 + $0x68] sm:$0xff]
        %v336 = vld [vmem:[#allocation5 + $0x70] sm:$0xff]
        %v337 = vld [vmem:[#allocation5 + $0x78] sm:$0xff]
        %v338 = vld [vmem:[%s289] sm:$0x1]
        %v340 = vlaneseq
        %v341 = vshrl.u32 %v340, 7
        %v342 = vsub.s32 0, %v341
        %v343 = vrot.slane %v338, %v342
        %345 = vmatprep.subr.mxu0 0.0
        %346 = vmatpush1.msra.mxu0 %v322
        %347 = vmatprep.subr.mxu0 0.0
        %348 = vmatpush1.msra.mxu0 %v323
        %349 = vmatprep.subr.mxu0 0.0
        %350 = vmatpush1.msra.mxu0 %v324
        %351 = vmatprep.subr.mxu0 0.0
        %352 = vmatpush1.msra.mxu0 %v325
        %353 = vmatprep.subr.mxu0 0.0
        %354 = vmatpush1.msra.mxu0 %v326
        %355 = vmatprep.subr.mxu0 0.0
        %356 = vmatpush1.msra.mxu0 %v327
        %357 = vmatprep.subr.mxu0 0.0
        %358 = vmatpush1.msra.mxu0 %v328
        %359 = vmatprep.subr.mxu0 0.0
        %360 = vmatpush1.msra.mxu0 %v329
        %361 = vmatprep.subr.mxu0 0.0
        %362 = vmatpush1.msra.mxu0 %v330
        %363 = vmatprep.subr.mxu0 0.0
        %364 = vmatpush1.msra.mxu0 %v331
        %365 = vmatprep.subr.mxu0 0.0
        %366 = vmatpush1.msra.mxu0 %v332
        %367 = vmatprep.subr.mxu0 0.0
        %368 = vmatpush1.msra.mxu0 %v333
        %369 = vmatprep.subr.mxu0 0.0
        %370 = vmatpush1.msra.mxu0 %v334
        %371 = vmatprep.subr.mxu0 0.0
        %372 = vmatpush1.msra.mxu0 %v335
        %373 = vmatprep.subr.mxu0 0.0
        %374 = vmatpush1.msra.mxu0 %v336
        %375 = vmatprep.subr.mxu0 0.0
        %376 = vmatpush1.msra.mxu0 %v337
        %377 = vmatprep.subr.mxu0 0.0
        %378 = vmatpush1.msra.mxu0 0.0
        %379 = vmatprep.subr.mxu0 0.0
        %380 = vmatpush1.msra.mxu0 0.0
        %381 = vmatprep.subr.mxu0 0.0
        %382 = vmatpush1.msra.mxu0 0.0
        %383 = vmatprep.subr.mxu0 0.0
        %384 = vmatpush1.msra.mxu0 0.0
        %385 = vmatprep.subr.mxu0 0.0
        %386 = vmatpush1.msra.mxu0 0.0
        %387 = vmatprep.subr.mxu0 0.0
        %388 = vmatpush1.msra.mxu0 0.0
        %389 = vmatprep.subr.mxu0 0.0
        %390 = vmatpush1.msra.mxu0 0.0
        %391 = vmatprep.subr.mxu0 0.0
        %392 = vmatpush1.msra.mxu0 0.0
        %393 = vmatprep.subr.mxu0 0.0
        %394 = vmatpush1.msra.mxu0 0.0
        %395 = vmatprep.subr.mxu0 0.0
        %396 = vmatpush1.msra.mxu0 0.0
        %397 = vmatprep.subr.mxu0 0.0
        %398 = vmatpush1.msra.mxu0 0.0
        %399 = vmatprep.subr.mxu0 0.0
        %400 = vmatpush1.msra.mxu0 0.0
        %401 = vmatprep.subr.mxu0 0.0
        %402 = vmatpush1.msra.mxu0 0.0
        %403 = vmatprep.subr.mxu0 0.0
        %404 = vmatpush1.msra.mxu0 0.0
        %405 = vmatprep.subr.mxu0 0.0
        %406 = vmatpush1.msra.mxu0 0.0
        %407 = vmatprep.subr.mxu0 0.0
        %408 = vmatpush1.msra.mxu0 0.0
        %409 = vmatprep.mubr.f32.mxu0 0.0
        %410 = vmatmul.mubr.f32.gmra.mrb[0].mxu0 %v321
        %v411 = vpop.f32.mrb[0].mxu0
        %v412 = vadd.f32 %v343, %v411
        %v413 = vpop.f32.mrb[0].mxu0
        %414 = vdwg.mxu0
        %415 = vst [vmem:[%s286] sm:$0xff] %v412
        %s416 = sand.u32 %s165, 1
        %s417 = scalar_lea.sflag [#allocation4], %s416
        %s418 = sand.u32 %s165, 1
        %s419 = smul.addr %s418, 8
        %s420 = scalar_lea.vmem [#allocation7], %s419
        // Predicated region
        $region49: #{tpu_custom_call.1} parent=39 // pred_check
          %p421 = pneg %p175
        $region50: #{tpu_custom_call.1} parent=39 // pred_check_branch
          %423 = sbr.rel (%p421) target = $region52
        $region51: #{tpu_custom_call.1} parent=39 // pred_region
          %s425 = ssub.s32 128, 128
          %426 = vsyncadd %s417, %s425
          %s427 = sadd.s32 %s27, %s28
          %s428 = smul.addr %s427, 128
          %s429 = scalar_lea.hbm %s5, %s428
          %s431 = sshll.u32 %s420, 4
          %s432 = int_to_ptr.vmem [resolvable:$true] %s431
          %434 = dma.vmem_to_hbm [thread:$0]  %s432, 128, %s429, %s417
        $region52: #{tpu_custom_call.1} parent=39 // pred_fallthru
          _
      $region40: #{tpu_custom_call.1} parent=5 // pred_fallthru
        _
      %p435 = scmp.le.s32.totalorder 2, %s18
      // Predicated region
      $region53: #{tpu_custom_call.1} parent=5 // pred_check
        %p436 = pneg %p435
      $region54: #{tpu_custom_call.1} parent=5 // pred_check_branch
        %438 = sbr.rel (%p436) target = $region56
      $region55: #{tpu_custom_call.1} parent=5 // pred_region
        %s439 = ssub.s32 %s18, 2
        // Predicated region
        $region57: #{tpu_custom_call.1} parent=55 // pred_check
          %p440 = pneg %p181
        $region58: #{tpu_custom_call.1} parent=55 // pred_check_branch
          %442 = sbr.rel (%p440) target = $region60
        $region59: #{tpu_custom_call.1} parent=55 // pred_region
          %s443 = sand.u32 %s166, 1
          %s444 = scalar_lea.sflag [#allocation4], %s443
          %s445 = sand.u32 %s166, 1
          %s446 = smul.addr %s445, 8
          %s447 = scalar_lea.vmem [#allocation7], %s446
          %448 = dma.done %s444, 128
        $region60: #{tpu_custom_call.1} parent=55 // pred_fallthru
          _
      $region56: #{tpu_custom_call.1} parent=5 // pred_fallthru
        _
    $region6: #{tpu_custom_call.1} parent=1 // loop_footer
      %s22 = sadd.s32 1, %s18
    $region7: #{tpu_custom_call.1} parent=1 // loop_footer_branch
      %17 = sbr.rel target = $region3
    $region8: #{tpu_custom_call.1} parent=1 // loop_exit
      _
    %449 = vsyncpa [#allocation3], 1
    %s450 = scalar_lea.sflag [#allocation3], 1
    %451 = vsyncpa %s450, 1
    %452 = vsyncpa [#allocation6], 1
    %453 = vsyncpa [#allocation4], 1
    %s454 = scalar_lea.sflag [#allocation4], 1
    %455 = vsyncpa %s454, 1

</llo_original>
